<compile_context>
chip_gen: v7x
topology: tpu7x:2x2x1
jax: 0.10.0
libtpu: 0.0.40
codegen_flags: <defaults>
</compile_context>

<pallas_src>
import jax
import jax.numpy as jnp
from jax.experimental import pallas as pl
from jax.experimental.pallas import tpu as pltpu


def _as_i32(v: int) -> int:
    """Reinterpret an unsigned 32-bit constant as a Python int32 value."""
    v &= 0xFFFFFFFF
    return v - (1 << 32) if v >= (1 << 31) else v


_FMIX_MUL1 = _as_i32(0x85EBCA6B)
_FMIX_MUL2 = _as_i32(0xC2B2AE35)
_GOLDEN = _as_i32(0x9E3779B9)


def _shr_logical(x, k: int):
    """Logical right shift on int32: arithmetic shift + mask of sign fill."""
    return (x >> k) & ((1 << (32 - k)) - 1)


def _fmix32(x):
    """murmur3 finalizer: maps distinct int32 counters to well-mixed bits."""
    x = x ^ _shr_logical(x, 16)
    x = x * jnp.int32(_FMIX_MUL1)
    x = x ^ _shr_logical(x, 13)
    x = x * jnp.int32(_FMIX_MUL2)
    x = x ^ _shr_logical(x, 16)
    return x


def _rand_like_kernel(seed_ref, out_ref):
    n, c = out_ref.shape
    # Per-element counter (2-D iota: TPU requires >=2-D).
    row = jax.lax.broadcasted_iota(jnp.int32, (n, c), 0)
    col = jax.lax.broadcasted_iota(jnp.int32, (n, c), 1)
    idx = row * jnp.int32(c) + col

    # Mix the SMEM seed into every counter, then hash.
    s = seed_ref[0]
    h = _fmix32(idx + s * jnp.int32(_GOLDEN))

    # Use 24 well-mixed bits -> non-negative int32 -> uniform [0, 1).
    u24 = (h & ((1 << 24) - 1)).astype(jnp.float32)
    out_ref[...] = u24 * jnp.float32(1.0 / (1 << 24))


def model_forward(x1, seed):
    """Forward pass of Model: returns uniform[0,1) noise of x1's shape/dtype.

    x1:   (N, 2) float32 (BatchNorm1d(2) implies 2 channels); only its
          shape/dtype matter for the returned value, so it never enters the
          kernel (saves one HBM->VMEM DMA).
    seed: (1,) int32 scalar, lives in SMEM.
    """
    return pl.pallas_call(
        _rand_like_kernel,
        out_shape=jax.ShapeDtypeStruct(x1.shape, jnp.float32),
        in_specs=[pl.BlockSpec(memory_space=pltpu.MemorySpace.SMEM)],
        out_specs=pl.BlockSpec(memory_space=pltpu.MemorySpace.VMEM),
    )(seed)


if __name__ == "__main__":
    key = jax.random.PRNGKey(0)
    N, C = 8, 2  # BatchNorm1d(2) => 2 features; small batch
    x1 = jax.random.normal(key, (N, C), dtype=jnp.float32)
    seed = jnp.array([0], dtype=jnp.int32)

    x3 = jax.block_until_ready(model_forward(x1, seed))

    assert x3.shape == (N, C) and x3.dtype == jnp.float32
    assert bool(jnp.all(x3 >= 0.0)) and bool(jnp.all(x3 < 1.0))
    assert float(jnp.std(x3)) > 0.0  # not a constant fill
    print("KERNEL_OK")
</pallas_src>

<mosaic_0001>
module attributes {stable_mosaic.version = 11 : i64} {
  func.func @_rand_like_kernel(%arg0: memref<1xi32, #tpu.memory_space<smem>>, %arg1: memref<8x2xf32, #tpu.memory_space<vmem>>) attributes {dimension_semantics = [], scalar_prefetch = 0 : i64, scratch_operands = 0 : i64, tpu.core_type = #tpu.core_type<tc>} {
    %0 = tpu.iota {dimensions = array<i32: 0>} : vector<8x2xi32>
    %1 = tpu.iota {dimensions = array<i32: 1>} : vector<8x2xi32>
    %c2_i32 = arith.constant 2 : i32
    %2 = vector.broadcast %c2_i32 : i32 to vector<8x2xi32>
    %3 = arith.muli %0, %2 : vector<8x2xi32>
    %4 = arith.addi %3, %1 : vector<8x2xi32>
    %c0 = arith.constant 0 : index
    %5 = memref.load %arg0[%c0] : memref<1xi32, #tpu.memory_space<smem>>
    %c-1640531527_i32 = arith.constant -1640531527 : i32
    %6 = arith.muli %5, %c-1640531527_i32 : i32
    %7 = vector.broadcast %6 : i32 to vector<8x2xi32>
    %8 = arith.addi %4, %7 : vector<8x2xi32>
    %c16_i32 = arith.constant 16 : i32
    %9 = vector.broadcast %c16_i32 : i32 to vector<8x2xi32>
    %10 = arith.shrsi %8, %9 : vector<8x2xi32>
    %c65535_i32 = arith.constant 65535 : i32
    %11 = vector.broadcast %c65535_i32 : i32 to vector<8x2xi32>
    %12 = arith.andi %10, %11 : vector<8x2xi32>
    %13 = arith.xori %8, %12 : vector<8x2xi32>
    %c-2048144789_i32 = arith.constant -2048144789 : i32
    %14 = vector.broadcast %c-2048144789_i32 : i32 to vector<8x2xi32>
    %15 = arith.muli %13, %14 : vector<8x2xi32>
    %c13_i32 = arith.constant 13 : i32
    %16 = vector.broadcast %c13_i32 : i32 to vector<8x2xi32>
    %17 = arith.shrsi %15, %16 : vector<8x2xi32>
    %c524287_i32 = arith.constant 524287 : i32
    %18 = vector.broadcast %c524287_i32 : i32 to vector<8x2xi32>
    %19 = arith.andi %17, %18 : vector<8x2xi32>
    %20 = arith.xori %15, %19 : vector<8x2xi32>
    %c-1028477387_i32 = arith.constant -1028477387 : i32
    %21 = vector.broadcast %c-1028477387_i32 : i32 to vector<8x2xi32>
    %22 = arith.muli %20, %21 : vector<8x2xi32>
    %c16_i32_0 = arith.constant 16 : i32
    %23 = vector.broadcast %c16_i32_0 : i32 to vector<8x2xi32>
    %24 = arith.shrsi %22, %23 : vector<8x2xi32>
    %c65535_i32_1 = arith.constant 65535 : i32
    %25 = vector.broadcast %c65535_i32_1 : i32 to vector<8x2xi32>
    %26 = arith.andi %24, %25 : vector<8x2xi32>
    %27 = arith.xori %22, %26 : vector<8x2xi32>
    %c16777215_i32 = arith.constant 16777215 : i32
    %28 = vector.broadcast %c16777215_i32 : i32 to vector<8x2xi32>
    %29 = arith.andi %27, %28 : vector<8x2xi32>
    %30 = arith.sitofp %29 : vector<8x2xi32> to vector<8x2xf32>
    %cst = arith.constant 5.96046448E-8 : f32
    %31 = vector.broadcast %cst : f32 to vector<8x2xf32>
    %32 = arith.mulf %30, %31 : vector<8x2xf32>
    %c0_2 = arith.constant 0 : index
    %c0_3 = arith.constant 0 : index
    %33 = vector.load %arg1[%c0_2, %c0_3] : memref<8x2xf32, #tpu.memory_space<vmem>>, vector<8x2xf32>
    tpu.vector_store %arg1[%c0_2, %c0_3], %32 {strides = array<i32>} : memref<8x2xf32, #tpu.memory_space<vmem>>, vector<8x2xf32>,
    return
  }
}

</mosaic_0001>

<llo_original>
// kernel: tpu_custom_call.1
$region0: #{tpu_custom_call.1}
  #allocation0 [shape = 'u32[]', space=smem, size = 0x4, offset = 0x4, fixed_abs, tag = 'smem constant byte address 0x4 - core index']
  #allocation1 [shape = 'u32[144,128]{1,0:T(1,128)}', space=vmem, size = 0x12000, scoped, tag = 'internal scratch']
  #allocation2 [shape = 's32[1]{0:T(128)S(6)}', space=smem, size = 0x200, scoped, tag = 'scoped memory for tpu_custom_call.1']
  %s0 = inlined_call_operand.<no memory space> [shape: s32[1], index: 0, kind: input, shape index: {}]
  %s1 = inlined_call_operand.vmem [shape: f32[8,2], index: 1, kind: output, shape index: {}]
  %s2 = sld [smem:[#allocation0]]
  $region14: #{tpu_custom_call.1} parent=0
    _
  %s4 = ssub.s32 1, %s2
  %s5 = scalar_select 0, %s4, %s2
  %6 = sst [smem:[#allocation2]] %s0
  // Predicated region
  $region2: #{tpu_custom_call.1} parent=0 // pred_check
    _
  $region3: #{tpu_custom_call.1} parent=0 // pred_check_branch
    %8 = sbr.rel (0) target = $region5
  $region4: #{tpu_custom_call.1} parent=0 // pred_region
    _
  $region5: #{tpu_custom_call.1} parent=0 // pred_fallthru
    _
  %v9 = vlaneseq
  %v10 = vshrl.u32 %v9, 7
  %v11 = vlaneseq
  %v12 = vand.u32 %v11, 127
  %v13 = vmul.u32 %v10, 2
  %v14 = vadd.s32 %v13, %v12
  %s15 = sld [smem:[#allocation2]]
  %s16 = smul.u32 %s15, 2654435769
  %v17 = vstv %s16
  %v18 = vadd.s32 %v14, %v17
  %v19 = vshra.s32 %v18, 16
  %v20 = vand.u32 %v19, 65535
  %v21 = vxor.u32 %v18, %v20
  %v22 = vmul.u32 %v21, 2246822507
  %v23 = vshra.s32 %v22, 13
  %v24 = vand.u32 %v23, 524287
  %v25 = vxor.u32 %v22, %v24
  %v26 = vmul.u32 %v25, 3266489909
  %v27 = vshra.s32 %v26, 16
  %v28 = vand.u32 %v27, 65535
  %v29 = vxor.u32 %v26, %v28
  %v30 = vand.u32 %v29, 16777215
  %v31 = vcvt.s32.f32 %v30
  %v32 = vmul.f32 %v31, 5.9604645e-08
  %vm33 = vcmask 15360
  %34 = vst.msk [vmem:[%s1] sm:$0xff] %vm33, %v32
  // Predicated region
  $region6: #{tpu_custom_call.1} parent=0 // pred_check
    _
  $region7: #{tpu_custom_call.1} parent=0 // pred_check_branch
    %36 = sbr.rel (0) target = $region9
  $region8: #{tpu_custom_call.1} parent=0 // pred_region
    _
  $region9: #{tpu_custom_call.1} parent=0 // pred_fallthru
    _
  // Predicated region
  $region10: #{tpu_custom_call.1} parent=0 // pred_check
    _
  $region11: #{tpu_custom_call.1} parent=0 // pred_check_branch
    %38 = sbr.rel (0) target = $region13
  $region12: #{tpu_custom_call.1} parent=0 // pred_region
    _
  $region13: #{tpu_custom_call.1} parent=0 // pred_fallthru
    _

</llo_original>
